<compile_context>
chip_gen: v5e
topology: v5e:2x2
jax: 0.10.0
libtpu: 0.0.40
codegen_flags: <defaults>
</compile_context>

<pallas_src>
import functools

import jax
import jax.numpy as jnp
from jax import lax
from jax.experimental import pallas as pl
from jax.experimental.pallas import tpu as pltpu


# ----------------------------------------------------------------------------
# Glue: bilinear resize matching PyTorch F.interpolate(mode='bilinear',
# align_corners=False) exactly (half-pixel centers, clamped, no antialias).
# ----------------------------------------------------------------------------
def _interp_matrix(out_size: int, in_size: int) -> jnp.ndarray:
    if out_size == in_size:
        return jnp.eye(in_size, dtype=jnp.float32)
    scale = in_size / out_size
    dst = jnp.arange(out_size, dtype=jnp.float32)
    src = jnp.maximum((dst + 0.5) * scale - 0.5, 0.0)
    lo = jnp.floor(src).astype(jnp.int32)
    hi = jnp.minimum(lo + 1, in_size - 1)
    w_hi = src - lo.astype(jnp.float32)
    w_lo = 1.0 - w_hi
    oh_lo = jax.nn.one_hot(lo, in_size, dtype=jnp.float32)
    oh_hi = jax.nn.one_hot(hi, in_size, dtype=jnp.float32)
    return w_lo[:, None] * oh_lo + w_hi[:, None] * oh_hi


def _bilinear_resize(x: jnp.ndarray, out_h: int, out_w: int) -> jnp.ndarray:
    Wh = _interp_matrix(out_h, x.shape[2])
    Ww = _interp_matrix(out_w, x.shape[3])
    return jnp.einsum("ih,nchw,jw->ncij", Wh, x.astype(jnp.float32), Ww)


# ----------------------------------------------------------------------------
# Pallas kernel: per-row BCE-with-logits sums + per-row soft-IoU terms.
# Grid = (row blocks [parallel], L blocks [arbitrary, innermost reduction]).
# Each row block writes a lane-dense (tb, 128) output tile:
#   lane 0 -> sum over L of the BCE terms for that row
#   lane 1 -> wiou = 1 - (inter + 1) / (union - inter + 1) for that row
# ----------------------------------------------------------------------------
def _loss_kernel(pred_ref, mask_ref, out_ref,
                 bce_acc, inter_acc, union_acc,
                 *, tb, tl, true_rows, true_cols,
                 need_row_mask, need_col_mask):
    i = pl.program_id(0)          # row-block index (parallel)
    j = pl.program_id(1)          # lane-block index (reduction over L)
    nj = pl.num_programs(1)

    @pl.when(j == 0)
    def _init_row_block():
        bce_acc[...] = jnp.zeros_like(bce_acc)
        inter_acc[...] = jnp.zeros_like(inter_acc)
        union_acc[...] = jnp.zeros_like(union_acc)

    x = pred_ref[...].astype(jnp.float32)   # (tb, tl) logits
    y = mask_ref[...].astype(jnp.float32)   # (tb, tl) targets

    # binary_cross_entropy_with_logits, stable form; reuse e = exp(-|x|)
    # for both the log term and the sigmoid (single exp per element).
    e = jnp.exp(-jnp.abs(x))
    bce = jnp.maximum(x, 0.0) - x * y + jnp.log1p(e)
    # sigmoid(x): 1/(1+e) for x>=0, e/(1+e) for x<0.
    r = 1.0 / (1.0 + e)
    p = jnp.where(x >= 0.0, r, e * r)

    if need_row_mask or need_col_mask:
        m = None
        if need_row_mask:
            rows = i * tb + lax.broadcasted_iota(jnp.int32, (tb, tl), 0)
            m = rows < true_rows
        if need_col_mask:
            cols = j * tl + lax.broadcasted_iota(jnp.int32, (tb, tl), 1)
            cm = cols < true_cols
            m = cm if m is None else jnp.logical_and(m, cm)
        mf = m.astype(jnp.float32)
        bce = bce * mf
        inter_term = p * y * mf
        union_term = (p + y) * mf
    else:
        inter_term = p * y
        union_term = p + y

    bce_acc[...] += jnp.sum(bce, axis=1, keepdims=True)           # (tb, 1)
    inter_acc[...] += jnp.sum(inter_term, axis=1, keepdims=True)  # (tb, 1)
    union_acc[...] += jnp.sum(union_term, axis=1, keepdims=True)  # (tb, 1)

    @pl.when(j == nj - 1)
    def _finalize_row_block():
        it = inter_acc[...]
        un = union_acc[...]
        # Padded rows have it == un == 0  ->  wiou == 0 (no contribution).
        wiou = 1.0 - (it + 1.0) / (un - it + 1.0)                 # (tb, 1)
        lane = lax.broadcasted_iota(jnp.int32, (tb, 128), 1)
        out_ref[...] = jnp.where(lane == 0, bce_acc[...],
                                 jnp.where(lane == 1, wiou, 0.0))


def _round_up(x: int, m: int) -> int:
    return (x + m - 1) // m * m


def bce_iou_loss(pred: jnp.ndarray, mask: jnp.ndarray,
                 *, block_bytes: int = 4 * 1024 * 1024) -> jnp.ndarray:
    """Equivalent of the PyTorch bce_iou_loss.forward (NCHW inputs)."""
    N, C, H, W = pred.shape
    if mask.shape[2:] != (H, W):
        mask = _bilinear_resize(mask, H, W)
    # Stream inputs in pred's native dtype (bf16 -> half the HBM traffic);
    # the kernel upcasts to f32 internally.
    mask = mask.astype(pred.dtype)

    B, L = N * C, H * W
    pred2 = pred.reshape(B, L)
    mask2 = mask.reshape(B, L)

    itemsize = jnp.dtype(pred2.dtype).itemsize
    budget_elems = max(block_bytes // itemsize, 8 * 128)

    Bp = _round_up(B, 8)
    Lp = _round_up(L, 128)

    # Lane tile: as wide as the budget allows with at least 8 rows per block.
    tl = min(Lp, max(128, (budget_elems // 8) // 128 * 128))
    # Row tile: fill the remaining per-block budget.
    tb = min(Bp, max(8, (budget_elems // tl) // 8 * 8))

    Bp = _round_up(Bp, tb)
    Lp = _round_up(Lp, tl)
    need_row_mask = Bp > B
    need_col_mask = Lp > L
    if need_row_mask or need_col_mask:
        pred2 = jnp.pad(pred2, ((0, Bp - B), (0, Lp - L)))
        mask2 = jnp.pad(mask2, ((0, Bp - B), (0, Lp - L)))

    nb, nl = Bp // tb, Lp // tl

    kernel = functools.partial(
        _loss_kernel,
        tb=tb, tl=tl,
        true_rows=B, true_cols=L,
        need_row_mask=need_row_mask, need_col_mask=need_col_mask)

    partials = pl.pallas_call(
        kernel,
        out_shape=jax.ShapeDtypeStruct((Bp, 128), jnp.float32),
        grid_spec=pltpu.PrefetchScalarGridSpec(
            num_scalar_prefetch=0,
            grid=(nb, nl),                       # reduction (L) axis innermost
            in_specs=[
                pl.BlockSpec((tb, tl), lambda i, j: (i, j)),
                pl.BlockSpec((tb, tl), lambda i, j: (i, j)),
            ],
            out_specs=pl.BlockSpec((tb, 128), lambda i, j: (i, 0)),
            scratch_shapes=[
                pltpu.VMEM((tb, 1), jnp.float32),   # per-row BCE partial sums
                pltpu.VMEM((tb, 1), jnp.float32),   # per-row inter partials
                pltpu.VMEM((tb, 1), jnp.float32),   # per-row union partials
            ],
        ),
        compiler_params=pltpu.CompilerParams(
            dimension_semantics=("parallel", "arbitrary"),
            vmem_limit_bytes=32 * 1024 * 1024),
        cost_estimate=pl.CostEstimate(
            flops=12 * B * L,
            transcendentals=2 * B * L,
            bytes_accessed=2 * B * L * itemsize + Bp * 128 * 4),
    )(pred2, mask2)

    # Tiny final reduce in plain JAX (negligible vs. the streamed inputs).
    bce_sum = jnp.sum(partials[:B, 0])
    wiou_sum = jnp.sum(partials[:B, 1])
    # (wbce + wiou).mean() == mean(bce) + mean(wiou)   (wbce is a scalar)
    return bce_sum / float(B * L) + wiou_sum / float(B)


# ----------------------------------------------------------------------------
# Pure-JAX reference (silent correctness check).
# ----------------------------------------------------------------------------
def _ref_loss(pred, mask):
    N, C, H, W = pred.shape
    if mask.shape[2:] != (H, W):
        mask = _bilinear_resize(mask, H, W)
    x = pred.astype(jnp.float32)
    y = mask.astype(jnp.float32)
    bce = jnp.maximum(x, 0.0) - x * y + jnp.log1p(jnp.exp(-jnp.abs(x)))
    wbce = jnp.mean(bce)
    p = jax.nn.sigmoid(x)
    inter = jnp.sum(p * y, axis=(2, 3))
    union = jnp.sum(p + y, axis=(2, 3))
    wiou = 1.0 - (inter + 1.0) / (union - inter + 1.0)
    return jnp.mean(wbce + wiou)


if __name__ == "__main__":
    key = jax.random.PRNGKey(0)
    k1, k2 = jax.random.split(key)

    # pred: logits at full resolution; mask: soft targets at half resolution
    # (exercises the bilinear-resize path, like the PyTorch module).
    pred = jax.random.normal(k1, (2, 4, 16, 16), dtype=jnp.float32)
    mask = jax.nn.sigmoid(jax.random.normal(k2, (2, 4, 8, 8), dtype=jnp.float32))

    loss = jax.block_until_ready(bce_iou_loss(pred, mask))
    ref = jax.block_until_ready(_ref_loss(pred, mask))

    assert jnp.allclose(loss, ref, rtol=1e-5, atol=1e-5), (loss, ref)
    print("KERNEL_OK")
</pallas_src>

<mosaic_0001>
module attributes {stable_mosaic.version = 11 : i64} {
  func.func @_loss_kernel(%arg0: i32, %arg1: i32, %arg2: memref<8x256xf32, #tpu.memory_space<vmem>>, %arg3: memref<8x256xf32, #tpu.memory_space<vmem>>, %arg4: memref<8x128xf32, #tpu.memory_space<vmem>>, %arg5: memref<8x1xf32, #tpu.memory_space<vmem>>, %arg6: memref<8x1xf32, #tpu.memory_space<vmem>>, %arg7: memref<8x1xf32, #tpu.memory_space<vmem>>) attributes {dimension_semantics = [#tpu.dimension_semantics<parallel>, #tpu.dimension_semantics<arbitrary>], iteration_bounds = array<i64: 1, 1>, scalar_prefetch = 0 : i64, scratch_operands = 3 : i64, tpu.core_type = #tpu.core_type<tc>, window_params = [{transform_indices = @transform_0, window_bounds = array<i64: 8, 256>}, {transform_indices = @transform_1, window_bounds = array<i64: 8, 256>}, {transform_indices = @transform_2, window_bounds = array<i64: 8, 128>}]} {
    %c0_i32 = arith.constant 0 : i32
    %0 = arith.cmpi eq, %arg1, %c0_i32 : i32
    %1 = arith.extui %0 : i1 to i32
    %c0_i32_0 = arith.constant 0 : i32
    %2 = arith.cmpi ne, %1, %c0_i32_0 : i32
    scf.if %2 {
      %cst_25 = arith.constant 0.000000e+00 : f32
      %43 = vector.broadcast %cst_25 : f32 to vector<8x1xf32>
      %c0_26 = arith.constant 0 : index
      %c0_27 = arith.constant 0 : index
      %44 = vector.load %arg5[%c0_26, %c0_27] : memref<8x1xf32, #tpu.memory_space<vmem>>, vector<8x1xf32>
      tpu.vector_store %arg5[%c0_26, %c0_27], %43 {strides = array<i32>} : memref<8x1xf32, #tpu.memory_space<vmem>>, vector<8x1xf32>,
      %cst_28 = arith.constant 0.000000e+00 : f32
      %45 = vector.broadcast %cst_28 : f32 to vector<8x1xf32>
      %c0_29 = arith.constant 0 : index
      %c0_30 = arith.constant 0 : index
      %46 = vector.load %arg6[%c0_29, %c0_30] : memref<8x1xf32, #tpu.memory_space<vmem>>, vector<8x1xf32>
      tpu.vector_store %arg6[%c0_29, %c0_30], %45 {strides = array<i32>} : memref<8x1xf32, #tpu.memory_space<vmem>>, vector<8x1xf32>,
      %cst_31 = arith.constant 0.000000e+00 : f32
      %47 = vector.broadcast %cst_31 : f32 to vector<8x1xf32>
      %c0_32 = arith.constant 0 : index
      %c0_33 = arith.constant 0 : index
      %48 = vector.load %arg7[%c0_32, %c0_33] : memref<8x1xf32, #tpu.memory_space<vmem>>, vector<8x1xf32>
      tpu.vector_store %arg7[%c0_32, %c0_33], %47 {strides = array<i32>} : memref<8x1xf32, #tpu.memory_space<vmem>>, vector<8x1xf32>,
    } else {
    }
    %c0 = arith.constant 0 : index
    %c0_1 = arith.constant 0 : index
    %3 = vector.load %arg2[%c0, %c0_1] : memref<8x256xf32, #tpu.memory_space<vmem>>, vector<8x256xf32>
    %c0_2 = arith.constant 0 : index
    %c0_3 = arith.constant 0 : index
    %4 = vector.load %arg3[%c0_2, %c0_3] : memref<8x256xf32, #tpu.memory_space<vmem>>, vector<8x256xf32>
    %5 = math.absf %3 : vector<8x256xf32>
    %cst = arith.constant 0.000000e+00 : f32
    %6 = vector.broadcast %cst : f32 to vector<8x256xf32>
    %7 = arith.subf %6, %5 : vector<8x256xf32>
    %8 = math.exp %7 : vector<8x256xf32>
    %cst_4 = arith.constant 0.000000e+00 : f32
    %9 = vector.broadcast %cst_4 : f32 to vector<8x256xf32>
    %10 = arith.maximumf %3, %9 : vector<8x256xf32>
    %11 = arith.mulf %3, %4 : vector<8x256xf32>
    %12 = arith.subf %10, %11 : vector<8x256xf32>
    %13 = math.log1p %8 : vector<8x256xf32>
    %14 = arith.addf %12, %13 : vector<8x256xf32>
    %cst_5 = arith.constant 1.000000e+00 : f32
    %15 = vector.broadcast %cst_5 : f32 to vector<8x256xf32>
    %16 = arith.addf %15, %8 : vector<8x256xf32>
    %cst_6 = arith.constant 1.000000e+00 : f32
    %17 = vector.broadcast %cst_6 : f32 to vector<8x256xf32>
    %18 = arith.divf %17, %16 : vector<8x256xf32>
    %cst_7 = arith.constant 0.000000e+00 : f32
    %19 = vector.broadcast %cst_7 : f32 to vector<8x256xf32>
    %20 = arith.cmpf oge, %3, %19 : vector<8x256xf32>
    %21 = arith.mulf %8, %18 : vector<8x256xf32>
    %22 = arith.select %20, %18, %21 : vector<8x256xi1>, vector<8x256xf32>
    %23 = arith.mulf %22, %4 : vector<8x256xf32>
    %24 = arith.addf %22, %4 : vector<8x256xf32>
    %c0_8 = arith.constant 0 : index
    %c0_9 = arith.constant 0 : index
    %25 = vector.load %arg5[%c0_8, %c0_9] : memref<8x1xf32, #tpu.memory_space<vmem>>, vector<8x1xf32>
    %cst_10 = arith.constant dense<0.000000e+00> : vector<8xf32>
    %26 = vector.multi_reduction <add>, %14, %cst_10 [1] : vector<8x256xf32> to vector<8xf32>
    %27 = vector.shape_cast %26 : vector<8xf32> to vector<8x1xf32>
    %28 = arith.addf %25, %27 : vector<8x1xf32>
    %c0_11 = arith.constant 0 : index
    %c0_12 = arith.constant 0 : index
    %29 = vector.load %arg5[%c0_11, %c0_12] : memref<8x1xf32, #tpu.memory_space<vmem>>, vector<8x1xf32>
    tpu.vector_store %arg5[%c0_11, %c0_12], %28 {strides = array<i32>} : memref<8x1xf32, #tpu.memory_space<vmem>>, vector<8x1xf32>,
    %c0_13 = arith.constant 0 : index
    %c0_14 = arith.constant 0 : index
    %30 = vector.load %arg6[%c0_13, %c0_14] : memref<8x1xf32, #tpu.memory_space<vmem>>, vector<8x1xf32>
    %cst_15 = arith.constant dense<0.000000e+00> : vector<8xf32>
    %31 = vector.multi_reduction <add>, %23, %cst_15 [1] : vector<8x256xf32> to vector<8xf32>
    %32 = vector.shape_cast %31 : vector<8xf32> to vector<8x1xf32>
    %33 = arith.addf %30, %32 : vector<8x1xf32>
    %c0_16 = arith.constant 0 : index
    %c0_17 = arith.constant 0 : index
    %34 = vector.load %arg6[%c0_16, %c0_17] : memref<8x1xf32, #tpu.memory_space<vmem>>, vector<8x1xf32>
    tpu.vector_store %arg6[%c0_16, %c0_17], %33 {strides = array<i32>} : memref<8x1xf32, #tpu.memory_space<vmem>>, vector<8x1xf32>,
    %c0_18 = arith.constant 0 : index
    %c0_19 = arith.constant 0 : index
    %35 = vector.load %arg7[%c0_18, %c0_19] : memref<8x1xf32, #tpu.memory_space<vmem>>, vector<8x1xf32>
    %cst_20 = arith.constant dense<0.000000e+00> : vector<8xf32>
    %36 = vector.multi_reduction <add>, %24, %cst_20 [1] : vector<8x256xf32> to vector<8xf32>
    %37 = vector.shape_cast %36 : vector<8xf32> to vector<8x1xf32>
    %38 = arith.addf %35, %37 : vector<8x1xf32>
    %c0_21 = arith.constant 0 : index
    %c0_22 = arith.constant 0 : index
    %39 = vector.load %arg7[%c0_21, %c0_22] : memref<8x1xf32, #tpu.memory_space<vmem>>, vector<8x1xf32>
    tpu.vector_store %arg7[%c0_21, %c0_22], %38 {strides = array<i32>} : memref<8x1xf32, #tpu.memory_space<vmem>>, vector<8x1xf32>,
    %c0_i32_23 = arith.constant 0 : i32
    %40 = arith.cmpi eq, %arg1, %c0_i32_23 : i32
    %41 = arith.extui %40 : i1 to i32
    %c0_i32_24 = arith.constant 0 : i32
    %42 = arith.cmpi ne, %41, %c0_i32_24 : i32
    scf.if %42 {
      %c0_25 = arith.constant 0 : index
      %c0_26 = arith.constant 0 : index
      %43 = vector.load %arg6[%c0_25, %c0_26] : memref<8x1xf32, #tpu.memory_space<vmem>>, vector<8x1xf32>
      %c0_27 = arith.constant 0 : index
      %c0_28 = arith.constant 0 : index
      %44 = vector.load %arg7[%c0_27, %c0_28] : memref<8x1xf32, #tpu.memory_space<vmem>>, vector<8x1xf32>
      %cst_29 = arith.constant 1.000000e+00 : f32
      %45 = vector.broadcast %cst_29 : f32 to vector<8x1xf32>
      %46 = arith.addf %43, %45 : vector<8x1xf32>
      %47 = arith.subf %44, %43 : vector<8x1xf32>
      %cst_30 = arith.constant 1.000000e+00 : f32
      %48 = vector.broadcast %cst_30 : f32 to vector<8x1xf32>
      %49 = arith.addf %47, %48 : vector<8x1xf32>
      %50 = arith.divf %46, %49 : vector<8x1xf32>
      %cst_31 = arith.constant 1.000000e+00 : f32
      %51 = vector.broadcast %cst_31 : f32 to vector<8x1xf32>
      %52 = arith.subf %51, %50 : vector<8x1xf32>
      %53 = tpu.iota {dimensions = array<i32: 1>} : vector<8x128xi32>
      %c0_i32_32 = arith.constant 0 : i32
      %54 = vector.broadcast %c0_i32_32 : i32 to vector<8x128xi32>
      %55 = arith.cmpi eq, %53, %54 : vector<8x128xi32>
      %c0_33 = arith.constant 0 : index
      %c0_34 = arith.constant 0 : index
      %56 = vector.load %arg5[%c0_33, %c0_34] : memref<8x1xf32, #tpu.memory_space<vmem>>, vector<8x1xf32>
      %c1_i32 = arith.constant 1 : i32
      %57 = vector.broadcast %c1_i32 : i32 to vector<8x128xi32>
      %58 = arith.cmpi eq, %53, %57 : vector<8x128xi32>
      %cst_35 = arith.constant 0.000000e+00 : f32
      %59 = vector.shape_cast %52 : vector<8x1xf32> to vector<8x1xf32>
      %60 = vector.broadcast %59 : vector<8x1xf32> to vector<8x128xf32>
      %61 = vector.broadcast %cst_35 : f32 to vector<8x128xf32>
      %62 = arith.select %58, %60, %61 : vector<8x128xi1>, vector<8x128xf32>
      %63 = vector.shape_cast %56 : vector<8x1xf32> to vector<8x1xf32>
      %64 = vector.broadcast %63 : vector<8x1xf32> to vector<8x128xf32>
      %65 = arith.select %55, %64, %62 : vector<8x128xi1>, vector<8x128xf32>
      %c0_36 = arith.constant 0 : index
      %c0_37 = arith.constant 0 : index
      %66 = vector.load %arg4[%c0_36, %c0_37] : memref<8x128xf32, #tpu.memory_space<vmem>>, vector<8x128xf32>
      tpu.vector_store %arg4[%c0_36, %c0_37], %65 {strides = array<i32>} : memref<8x128xf32, #tpu.memory_space<vmem>>, vector<8x128xf32>,
    } else {
    }
    return
  }
  func.func @transform_0(%arg0: i32, %arg1: i32) -> (i32, i32) {
    %c0_i32 = arith.constant 0 : i32
    return %arg0, %arg1 : i32, i32
  }
  func.func @transform_1(%arg0: i32, %arg1: i32) -> (i32, i32) {
    %c0_i32 = arith.constant 0 : i32
    return %arg0, %arg1 : i32, i32
  }
  func.func @transform_2(%arg0: i32, %arg1: i32) -> (i32, i32) {
    %c0_i32 = arith.constant 0 : i32
    %c0_i32_0 = arith.constant 0 : i32
    return %arg0, %c0_i32 : i32, i32
  }
}

</mosaic_0001>

<llo_original>
// kernel: tpu_custom_call.1
$region0: #{tpu_custom_call.1}
  #allocation0 [shape = 'u32[]', space=smem, size = 0x4, offset = 0x4, fixed_abs, tag = 'smem constant byte address 0x4 - core index']
  #allocation1 [shape = 'u32[72,128]{1,0:T(1,128)}', space=vmem, size = 0x9000, scoped, tag = 'internal scratch']
  #allocation2 [shape = 'f32[8,1]{1,0:T(8,128)}', space=vmem, size = 0x1000, scoped, tag = 'scratch operand']
  #allocation3 [shape = 'f32[8,1]{1,0:T(8,128)}', space=vmem, size = 0x1000, scoped, tag = 'scratch operand']
  #allocation4 [shape = 'f32[8,1]{1,0:T(8,128)}', space=vmem, size = 0x1000, scoped, tag = 'scratch operand']
  %s0 = inlined_call_operand.hbm [shape: f32[8,256], index: 0, kind: input, shape index: {}]
  %s1 = inlined_call_operand.hbm [shape: f32[8,256], index: 1, kind: input, shape index: {}]
  %s2 = inlined_call_operand.hbm [shape: f32[8,128], index: 2, kind: output, shape index: {}]
  %s3 = sld [smem:[#allocation0]]
  $region34: #{tpu_custom_call.1} parent=0
    _
  %s5 = ssub.s32 1, %s3
  %s6 = scalar_select 0, %s5, %s3
  $region1: #{tpu_custom_call.1} parent=0
    #allocation5 [shape = 'u8[8192]{0}', space=vmem, size = 0x2000, scoped, tag = 'input window, operand 0, single buffered']
    #allocation6 [shape = 's32[1]{0}', space=sflag, size = 0x4, scoped, tag = 'scoped memory for tpu_custom_call.1']
    #allocation7 [shape = 's32[1]{0}', space=sflag, size = 0x4, scoped, tag = 'scoped memory for tpu_custom_call.1']
    #allocation8 [shape = 'u8[8192]{0}', space=vmem, size = 0x2000, scoped, tag = 'input window, operand 1, single buffered']
    #allocation9 [shape = 's32[1]{0}', space=sflag, size = 0x4, scoped, tag = 'scoped memory for tpu_custom_call.1']
    #allocation10 [shape = 'u8[4096]{0}', space=vmem, size = 0x1000, scoped, tag = 'output window, operand 0, single buffered']
    %7 = vsyncpa [#allocation6], 0
    %8 = vsyncpa [#allocation9], 0
    %9 = vsyncpa [#allocation7], 0
    // Predicated region
    $region2: #{tpu_custom_call.1} parent=1 // pred_check
      _
    $region3: #{tpu_custom_call.1} parent=1 // pred_check_branch
      %11 = sbr.rel (0) target = $region5
    $region4: #{tpu_custom_call.1} parent=1 // pred_region
      %13 = vsyncadd [#allocation6], 0
      %s15 = sshll.u32 %s0, 4
      %s16 = int_to_ptr.hbm [resolvable:$true] %s15
      %s17 = sshll.u32 [#allocation5], 4
      %s18 = int_to_ptr.vmem [resolvable:$true] %s17
      %20 = dma.hbm_to_vmem [thread:$0]  %s16, 256, %s18, [#allocation6]
    $region5: #{tpu_custom_call.1} parent=1 // pred_fallthru
      _
    // Predicated region
    $region6: #{tpu_custom_call.1} parent=1 // pred_check
      _
    $region7: #{tpu_custom_call.1} parent=1 // pred_check_branch
      %22 = sbr.rel (0) target = $region9
    $region8: #{tpu_custom_call.1} parent=1 // pred_region
      %24 = vsyncadd [#allocation9], 0
      %s26 = sshll.u32 %s1, 4
      %s27 = int_to_ptr.hbm [resolvable:$true] %s26
      %s28 = sshll.u32 [#allocation8], 4
      %s29 = int_to_ptr.vmem [resolvable:$true] %s28
      %31 = dma.hbm_to_vmem [thread:$0]  %s27, 256, %s29, [#allocation9]
    $region9: #{tpu_custom_call.1} parent=1 // pred_fallthru
      _
    // Predicated region
    $region10: #{tpu_custom_call.1} parent=1 // pred_check
      _
    $region11: #{tpu_custom_call.1} parent=1 // pred_check_branch
      %33 = sbr.rel (0) target = $region13
    $region12: #{tpu_custom_call.1} parent=1 // pred_region
      %35 = dma.done [#allocation6], 256
    $region13: #{tpu_custom_call.1} parent=1 // pred_fallthru
      _
    // Predicated region
    $region14: #{tpu_custom_call.1} parent=1 // pred_check
      _
    $region15: #{tpu_custom_call.1} parent=1 // pred_check_branch
      %37 = sbr.rel (0) target = $region17
    $region16: #{tpu_custom_call.1} parent=1 // pred_region
      %39 = dma.done [#allocation9], 256
    $region17: #{tpu_custom_call.1} parent=1 // pred_fallthru
      _
    %p40 = scmp.eq.s32.totalorder 0, 0
    // Predicated region
    $region18: #{tpu_custom_call.1} parent=1 // pred_check
      %p41 = pneg %p40
    $region19: #{tpu_custom_call.1} parent=1 // pred_check_branch
      %43 = sbr.rel (%p41) target = $region21
    $region20: #{tpu_custom_call.1} parent=1 // pred_region
      %vm44 = vcmask 7168
      %45 = vst.msk [vmem:[#allocation2] sm:$0xff] %vm44, 0.0
      %46 = vst.msk [vmem:[#allocation3] sm:$0xff] %vm44, 0.0
      %47 = vst.msk [vmem:[#allocation4] sm:$0xff] %vm44, 0.0
    $region21: #{tpu_custom_call.1} parent=1 // pred_fallthru
      _
    %v48 = vld [vmem:[#allocation5] sm:$0xff]
    %v49 = vld [vmem:[#allocation5 + $0x8] sm:$0xff]
    %v50 = vld [vmem:[#allocation8] sm:$0xff]
    %v51 = vld [vmem:[#allocation8 + $0x8] sm:$0xff]
    %v52 = vand.u32 2147483647, %v48
    %v53 = vand.u32 2147483647, %v49
    %v54 = vsub.f32 0.0, %v52
    %v55 = vsub.f32 0.0, %v53
    %v56 = vmul.f32 %v54, 1.442695
    %v57 = vpow.pop %v56
    %v58 = vmul.f32 %v55, 1.442695
    %v59 = vpow.pop %v58
    %v60 = vmax.f32 %v48, 0.0
    %v61 = vmax.f32 %v49, 0.0
    %v62 = vmul.f32 %v48, %v50
    %v63 = vmul.f32 %v49, %v51
    %v64 = vsub.f32 %v60, %v62
    %v65 = vsub.f32 %v61, %v63
    %v66 = vadd.f32 %v57, 1.0
    %v67 = vlog2.pop %v66
    %v68 = vmul.f32 %v67, 0.6931472
    %v69 = vmul.f32 -0.5, %v57
    %v70 = vadd.f32 %v69, 1.0
    %v71 = vmul.f32 %v70, %v57
    %v72 = vand.u32 2147483647, %v57
    %vm73 = vcmp.lt.f32.partialorder %v72, 0.0004427343
    %v74 = vsel %vm73, %v71, %v68
    %v75 = vadd.f32 %v59, 1.0
    %v76 = vlog2.pop %v75
    %v77 = vmul.f32 %v76, 0.6931472
    %v78 = vmul.f32 -0.5, %v59
    %v79 = vadd.f32 %v78, 1.0
    %v80 = vmul.f32 %v79, %v59
    %v81 = vand.u32 2147483647, %v59
    %vm82 = vcmp.lt.f32.partialorder %v81, 0.0004427343
    %v83 = vsel %vm82, %v80, %v77
    %v84 = vadd.f32 %v64, %v74
    %v85 = vadd.f32 %v65, %v83
    %v86 = vadd.f32 %v57, 1.0
    %v87 = vadd.f32 %v59, 1.0
    %v88 = vrcp.pop %v86
    %v89 = vmul.f32 %v86, %v88
    %v90 = vsub.f32 1.0, %v89
    %v91 = vmul.f32 %v88, %v90
    %v92 = vadd.f32 %v88, %v91
    %vm93 = vweird.f32 %v86
    %vm94 = vweird.f32 %v88
    %vm95 = vmor %vm93, %vm94
    %v96 = vsel %vm95, %v88, %v92
    %v97 = vand.u32 2147483647, %v86
    %vm98 = vcmp.eq.f32.partialorder %v97, 8.507059e+37
    %v99 = vand.u32 %v86, 2147483648
    %v100 = vor.u32 1.1754944e-38, %v99
    %v101 = vsel %vm98, %v100, %v96
    %v102 = vmul.f32 1.0, %v101
    %v103 = vrcp.pop %v87
    %v104 = vmul.f32 %v87, %v103
    %v105 = vsub.f32 1.0, %v104
    %v106 = vmul.f32 %v103, %v105
    %v107 = vadd.f32 %v103, %v106
    %vm108 = vweird.f32 %v87
    %vm109 = vweird.f32 %v103
    %vm110 = vmor %vm108, %vm109
    %v111 = vsel %vm110, %v103, %v107
    %v112 = vand.u32 2147483647, %v87
    %vm113 = vcmp.eq.f32.partialorder %v112, 8.507059e+37
    %v114 = vand.u32 %v87, 2147483648
    %v115 = vor.u32 1.1754944e-38, %v114
    %v116 = vsel %vm113, %v115, %v111
    %v117 = vmul.f32 1.0, %v116
    %vm118 = vcmp.ge.f32.partialorder %v48, 0.0
    %vm119 = vcmp.ge.f32.partialorder %v49, 0.0
    %v120 = vmul.f32 %v57, %v102
    %v121 = vmul.f32 %v59, %v117
    %v122 = vsel %vm118, %v102, %v120
    %v123 = vsel %vm119, %v117, %v121
    %v124 = vmul.f32 %v122, %v50
    %v125 = vmul.f32 %v123, %v51
    %v126 = vadd.f32 %v122, %v50
    %v127 = vadd.f32 %v123, %v51
    %v128 = vld [vmem:[#allocation2] sm:$0xff]
    %v129 = vadd.f32 %v84, %v85
    %130 = vadd.xlane.f32.xlu0 %v129
    %v131 = vpop.xlane.xlu0 %130
    %v132 = vadd.f32 %v128, %v131
    %vm133 = vcmask 7168
    %134 = vst.msk [vmem:[#allocation2] sm:$0xff] %vm133, %v132
    %v135 = vld [vmem:[#allocation3] sm:$0xff]
    %v136 = vadd.f32 %v124, %v125
    %137 = vadd.xlane.f32.xlu0 %v136
    %v138 = vpop.xlane.xlu0 %137
    %v139 = vadd.f32 %v135, %v138
    %140 = vst.msk [vmem:[#allocation3] sm:$0xff] %vm133, %v139
    %v141 = vld [vmem:[#allocation4] sm:$0xff]
    %v142 = vadd.f32 %v126, %v127
    %143 = vadd.xlane.f32.xlu0 %v142
    %v144 = vpop.xlane.xlu0 %143
    %v145 = vadd.f32 %v141, %v144
    %146 = vst.msk [vmem:[#allocation4] sm:$0xff] %vm133, %v145
    // Predicated region
    $region22: #{tpu_custom_call.1} parent=1 // pred_check
      %p147 = pneg %p40
    $region23: #{tpu_custom_call.1} parent=1 // pred_check_branch
      %149 = sbr.rel (%p147) target = $region25
    $region24: #{tpu_custom_call.1} parent=1 // pred_region
      %v150 = vld [vmem:[#allocation3] sm:$0xff]
      %v151 = vld [vmem:[#allocation4] sm:$0xff]
      %v152 = vadd.f32 %v150, 1.0
      %v153 = vsub.f32 %v151, %v150
      %v154 = vadd.f32 %v153, 1.0
      %v155 = vrcp.pop %v154
      %v156 = vmul.f32 %v154, %v155
      %v157 = vsub.f32 1.0, %v156
      %v158 = vmul.f32 %v155, %v157
      %v159 = vadd.f32 %v155, %v158
      %vm160 = vweird.f32 %v154
      %vm161 = vweird.f32 %v155
      %vm162 = vmor %vm160, %vm161
      %v163 = vsel %vm162, %v155, %v159
      %v164 = vand.u32 2147483647, %v154
      %vm165 = vcmp.eq.f32.partialorder %v164, 8.507059e+37
      %v166 = vand.u32 %v154, 2147483648
      %v167 = vor.u32 1.1754944e-38, %v166
      %v168 = vsel %vm165, %v167, %v163
      %v169 = vmul.f32 %v152, %v168
      %v170 = vsub.f32 1.0, %v169
      %v171 = vlaneseq
      %v172 = vand.u32 %v171, 127
      %vm173 = vcmp.eq.s32.totalorder %v172, 0
      %v174 = vld [vmem:[#allocation2] sm:$0xff]
      %vm175 = vcmp.eq.s32.totalorder %v172, 1
      %177 = vset.pattern.permute.xlu0 0
      %178 = vperm.xlu0 %177, %v170
      %v179 = vpop.permute.xlu0 %178
      %v181 = vsel %vm175, %v179, 0.0
      %183 = vset.pattern.permute.xlu0 0
      %184 = vperm.xlu0 %183, %v174
      %v185 = vpop.permute.xlu0 %184
      %v187 = vsel %vm173, %v185, %v181
      %188 = vst [vmem:[#allocation10] sm:$0xff] %v187
    $region25: #{tpu_custom_call.1} parent=1 // pred_fallthru
      _
    // Predicated region
    $region26: #{tpu_custom_call.1} parent=1 // pred_check
      _
    $region27: #{tpu_custom_call.1} parent=1 // pred_check_branch
      %190 = sbr.rel (0) target = $region29
    $region28: #{tpu_custom_call.1} parent=1 // pred_region
      %192 = vsyncadd [#allocation7], 0
      %s194 = sshll.u32 [#allocation10], 4
      %s195 = int_to_ptr.vmem [resolvable:$true] %s194
      %s196 = sshll.u32 %s2, 4
      %s197 = int_to_ptr.hbm [resolvable:$true] %s196
      %199 = dma.vmem_to_hbm [thread:$0]  %s195, 128, %s197, [#allocation7]
    $region29: #{tpu_custom_call.1} parent=1 // pred_fallthru
      _
    // Predicated region
    $region30: #{tpu_custom_call.1} parent=1 // pred_check
      _
    $region31: #{tpu_custom_call.1} parent=1 // pred_check_branch
      %201 = sbr.rel (0) target = $region33
    $region32: #{tpu_custom_call.1} parent=1 // pred_region
      %203 = dma.done [#allocation7], 128
    $region33: #{tpu_custom_call.1} parent=1 // pred_fallthru
      _
    %204 = vsyncpa [#allocation6], 1
    %205 = vsyncpa [#allocation9], 1
    %206 = vsyncpa [#allocation7], 1

</llo_original>
